<compile_context>
chip_gen: v5e
topology: v5e:2x2
jax: 0.10.0
libtpu: 0.0.40
codegen_flags: <defaults>
</compile_context>

<pallas_src>
import functools

import jax
import jax.numpy as jnp
from jax import lax
from jax.experimental import pallas as pl
from jax.experimental.pallas import tpu as pltpu


_MIB = 1024 * 1024


def _vmem_capacity_bytes():
    """Physical VMEM of the current chip; conservative fallback if unknown."""
    try:
        return int(pltpu.get_tpu_info().vmem_capacity_bytes)
    except Exception:
        return 64 * _MIB  # safe everywhere (v7x-sized)


def _per_step_bytes(tq, S, D, itemsize, w_itemsize, exp_itemsize):
    """Approximate per-grid-step VMEM footprint for a given q tile."""
    ctx_block = 2 * S * D * itemsize          # double-buffered resident context
    out_block = 2 * tq * D * itemsize         # double-buffered output tile
    w_block = 2 * tq * S * w_itemsize         # double-buffered weights tile
    interm = tq * S * 4 + tq * S * exp_itemsize   # f32 scores + exp slab
    if w_itemsize:
        interm += tq * S * 4                  # materialized f32 weights slab
    interm += tq * D * 4                      # f32 output accumulator
    return ctx_block + out_block + w_block + interm


def _pick_q_tile(S, D, itemsize, w_itemsize, exp_itemsize, vmem_cap):
    """Largest MXU-friendly q tile whose footprint fits the VMEM budget."""
    budget = int(0.70 * vmem_cap)
    if vmem_cap <= 80 * _MIB:
        # v7x-class (64 MiB VMEM): 256-wide MXU is reasonably fed at M=128-256,
        # and the (Tq, S) intermediates must stay small.
        candidates = (256, 128)
    else:
        # v5e/v6e-class (128 MiB VMEM).  (v5e's 4x128 MXU is full at M=128,
        # but larger tiles still cut per-step overhead when they fit.)
        candidates = (512, 256, 128)
    dividing = [c for c in candidates if S % c == 0]
    for cand in dividing:
        if _per_step_bytes(cand, S, D, itemsize, w_itemsize, exp_itemsize) <= budget:
            return cand
    if dividing:
        return dividing[-1]   # smallest dividing tile = least VMEM pressure
    return S                  # small / odd S: one full-extent block


def _attention_body(ctx_ref, out_ref, w_ref, *, tq, exp_dtype):
    x = ctx_ref[...]                                      # (S, D) resident block

    # Query tile is a view into the resident context block (no extra DMA).
    q_start = pl.multiple_of(pl.program_id(1) * tq, tq)
    q = ctx_ref[pl.ds(q_start, tq), :]                    # (Tq, D)

    # scores = q @ x^T via contraction on the last dim of both operands
    # (MXU transposed-RHS mode) -- no materialized transpose.
    scores = lax.dot_general(
        q, x,
        dimension_numbers=(((1,), (1,)), ((), ())),
        preferred_element_type=jnp.float32)               # (Tq, S) f32

    # Exact softmax along the key axis (the full key axis lives in this block).
    m = jnp.max(scores, axis=-1, keepdims=True)
    if exp_dtype == jnp.float32:
        e = jnp.exp(scores - m)                           # (Tq, S) f32
        denom = jnp.sum(e, axis=-1, keepdims=True)
    else:
        # bf16 exponent (EUP bf16 on v6e/v7x): half the vreg/VMEM footprint of
        # the exp slab; the row-sum still accumulates in f32.
        e = jnp.exp((scores - m).astype(exp_dtype))       # (Tq, S) bf16
        denom = jnp.sum(e, axis=-1, keepdims=True, dtype=jnp.float32)

    # EUP approximate reciprocal + one Newton step keeps |sum(w)-1| << 1e-5.
    r = pl.reciprocal(denom, approx=True)
    r = r * (2.0 - denom * r)                             # (Tq, 1) f32

    if w_ref is None:
        # Deferred normalization: (e @ x) * r avoids a (Tq, S) VPU multiply and
        # one full (Tq, S) live slab.
        out = lax.dot_general(
            e.astype(x.dtype), x,
            dimension_numbers=(((1,), (0,)), ((), ())),
            preferred_element_type=jnp.float32)           # (Tq, D) f32
        out = out * r
    else:
        weights = e.astype(jnp.float32) * r               # (Tq, S) f32
        w_ref[...] = weights.astype(w_ref.dtype)
        out = lax.dot_general(
            weights.astype(x.dtype), x,
            dimension_numbers=(((1,), (0,)), ((), ())),
            preferred_element_type=jnp.float32)           # (Tq, D) f32

    out_ref[...] = out.astype(out_ref.dtype)


def _kernel_with_weights(ctx_ref, out_ref, w_ref, *, tq, exp_dtype):
    _attention_body(ctx_ref, out_ref, w_ref, tq=tq, exp_dtype=exp_dtype)


def _kernel_no_weights(ctx_ref, out_ref, *, tq, exp_dtype):
    _attention_body(ctx_ref, out_ref, None, tq=tq, exp_dtype=exp_dtype)


def nonparametric_self_attention(context, return_weights=True, tq=None,
                                 weights_dtype=None, exp_dtype=None):
    """context: [B, S, D] -> (context_, attention_weights) like the torch module.

    weights_dtype: dtype of the returned attention weights (default f32 to match
        torch).  Pass jnp.bfloat16 for large S to halve the B*S^2 HBM writeback.
    exp_dtype: dtype of the softmax exponent.  Defaults to bf16 only when the
        input is bf16 (keeps f32 inputs bit-exact-ish); otherwise f32.
    """
    B, S, D = context.shape
    dtype = context.dtype
    itemsize = jnp.dtype(dtype).itemsize

    if weights_dtype is None:
        weights_dtype = jnp.float32
    if exp_dtype is None:
        exp_dtype = jnp.bfloat16 if dtype == jnp.bfloat16 else jnp.float32

    w_itemsize = jnp.dtype(weights_dtype).itemsize if return_weights else 0
    exp_itemsize = jnp.dtype(exp_dtype).itemsize

    vmem_cap = _vmem_capacity_bytes()
    if tq is None:
        tq = _pick_q_tile(S, D, itemsize, w_itemsize, exp_itemsize, vmem_cap)
    assert S % tq == 0, "query tile must divide the sequence length"
    n_q = S // tq

    # Single input: the full context block per batch element; constant index
    # across the inner q-tile axis so it is only DMA'd once per batch element.
    in_specs = [
        pl.BlockSpec((pl.Squeezed(), S, D), lambda b, i: (b, 0, 0)),
    ]
    out_spec_ctx = pl.BlockSpec((pl.Squeezed(), tq, D), lambda b, i: (b, i, 0))

    # Advisory cost estimate for the XLA scheduler.
    flops = 4 * B * S * S * D                     # two matmuls, 2*S*S*D each
    transcendentals = B * S * S                   # exp
    bytes_accessed = 2 * B * S * D * itemsize + B * S * S * w_itemsize
    cost = pl.CostEstimate(flops=flops,
                           transcendentals=transcendentals,
                           bytes_accessed=bytes_accessed)

    # VMEM limit derived from the same footprint model used for tile selection,
    # capped below the chip's physical capacity (headroom for compiler scratch).
    per_step = _per_step_bytes(tq, S, D, itemsize, w_itemsize, exp_itemsize)
    cap = int(0.82 * vmem_cap)                    # ~52 MiB v7x, ~105 MiB v5e/v6e
    vmem_limit = int(min(cap, max(32 * _MIB, int(1.3 * per_step))))
    vmem_limit = max(vmem_limit, 16 * _MIB)

    compiler_params = pltpu.CompilerParams(
        # Both axes independent -> megacore sharding on v7x.  If a flash-style
        # key axis is ever added it must be appended LAST and marked "arbitrary".
        dimension_semantics=("parallel", "parallel"),
        vmem_limit_bytes=vmem_limit,
    )

    if return_weights:
        kernel = functools.partial(_kernel_with_weights, tq=tq, exp_dtype=exp_dtype)
        out_shape = (
            jax.ShapeDtypeStruct((B, S, D), dtype),          # context_
            jax.ShapeDtypeStruct((B, S, S), weights_dtype),  # attention weights
        )
        out_specs = [
            out_spec_ctx,
            pl.BlockSpec((pl.Squeezed(), tq, S), lambda b, i: (b, i, 0)),
        ]
    else:
        kernel = functools.partial(_kernel_no_weights, tq=tq, exp_dtype=exp_dtype)
        out_shape = jax.ShapeDtypeStruct((B, S, D), dtype)
        out_specs = out_spec_ctx

    return pl.pallas_call(
        kernel,
        out_shape=out_shape,
        grid_spec=pltpu.PrefetchScalarGridSpec(
            num_scalar_prefetch=0,
            grid=(B, n_q),
            in_specs=in_specs,
            out_specs=out_specs,
        ),
        compiler_params=compiler_params,
        cost_estimate=cost,
    )(context)


def _reference(context):
    scores = jnp.einsum("bsd,btd->bst", context, context)
    weights = jax.nn.softmax(scores, axis=-1)
    out = jnp.einsum("bst,btd->bsd", weights, context)
    return out, weights


if __name__ == "__main__":
    key = jax.random.PRNGKey(0)

    # ---- Small shape matching the torch module's docstring regime ----
    B, S, D = 2, 8, 32
    context = jax.random.normal(key, (B, S, D), dtype=jnp.float32)

    context_, attn_weights = nonparametric_self_attention(context, return_weights=True)
    jax.block_until_ready((context_, attn_weights))

    ref_out, ref_w = _reference(context)
    assert jnp.allclose(context_, ref_out, atol=1e-5, rtol=1e-5)
    assert jnp.allclose(attn_weights, ref_w, atol=1e-5, rtol=1e-5)
    assert jnp.allclose(jnp.sum(attn_weights, axis=-1), 1.0, atol=1e-5)

    context_only = nonparametric_self_attention(context, return_weights=False)
    jax.block_until_ready(context_only)
    assert jnp.allclose(context_only, ref_out, atol=1e-5, rtol=1e-5)

    # ---- Tile-aligned shape exercising the multi-q-tile path (n_q > 1) ----
    key2 = jax.random.PRNGKey(0)
    B2, S2, D2 = 1, 256, 128
    context2 = 0.1 * jax.random.normal(key2, (B2, S2, D2), dtype=jnp.float32)

    out2, w2 = nonparametric_self_attention(context2, return_weights=True, tq=128)
    jax.block_until_ready((out2, w2))
    ref_out2, ref_w2 = _reference(context2)
    assert jnp.allclose(out2, ref_out2, atol=1e-3, rtol=1e-3)
    assert jnp.allclose(w2, ref_w2, atol=1e-3, rtol=1e-3)
    assert jnp.allclose(jnp.sum(w2, axis=-1), 1.0, atol=1e-3)

    out2_only = nonparametric_self_attention(context2, return_weights=False, tq=128)
    jax.block_until_ready(out2_only)
    assert jnp.allclose(out2_only, ref_out2, atol=1e-3, rtol=1e-3)

    print("KERNEL_OK")
</pallas_src>

<mosaic_0001>
module attributes {stable_mosaic.version = 11 : i64} {
  func.func @_kernel_with_weights(%arg0: i32, %arg1: i32, %arg2: memref<1x8x32xf32, #tpu.memory_space<vmem>>, %arg3: memref<1x8x32xf32, #tpu.memory_space<vmem>>, %arg4: memref<1x8x8xf32, #tpu.memory_space<vmem>>) attributes {dimension_semantics = [#tpu.dimension_semantics<parallel>, #tpu.dimension_semantics<parallel>], iteration_bounds = array<i64: 2, 1>, scalar_prefetch = 0 : i64, scratch_operands = 0 : i64, tpu.core_type = #tpu.core_type<tc>, window_params = [{transform_indices = @transform_0, window_bounds = array<i64: 1, 8, 32>}, {transform_indices = @transform_1, window_bounds = array<i64: 1, 8, 32>}, {transform_indices = @transform_2, window_bounds = array<i64: 1, 8, 8>}]} {
    %c0 = arith.constant 0 : index
    %c0_0 = arith.constant 0 : index
    %c0_1 = arith.constant 0 : index
    %0 = vector.load %arg2[%c0, %c0_0, %c0_1] : memref<1x8x32xf32, #tpu.memory_space<vmem>>, vector<1x8x32xf32>
    %1 = vector.shape_cast %0 : vector<1x8x32xf32> to vector<8x32xf32>
    %c8_i32 = arith.constant 8 : i32
    %2 = arith.muli %arg1, %c8_i32 : i32
    %3 = tpu.assume_multiple %2, 8 : i32
    %c0_2 = arith.constant 0 : index
    %4 = arith.index_cast %3 : i32 to index
    %c0_3 = arith.constant 0 : index
    %5 = vector.load %arg2[%c0_2, %4, %c0_3] : memref<1x8x32xf32, #tpu.memory_space<vmem>>, vector<1x8x32xf32>
    %6 = vector.shape_cast %5 : vector<1x8x32xf32> to vector<8x32xf32>
    %cst = arith.constant dense<0.000000e+00> : vector<8x8xf32>
    %7 = tpu.matmul %6, %1, %cst {dimension_numbers = #tpu.dot_dimension_numbers<[1], [1], [0], [0], [0, 0, 1, 0], [], []>} : vector<8x32xf32>, vector<8x32xf32>, vector<8x8xf32> -> vector<8x8xf32>
    %cst_4 = arith.constant dense<0xFF800000> : vector<8xf32>
    %8 = vector.multi_reduction <maximumf>, %7, %cst_4 [1] : vector<8x8xf32> to vector<8xf32>
    %9 = vector.shape_cast %8 : vector<8xf32> to vector<8x1xf32>
    %10 = vector.broadcast %9 : vector<8x1xf32> to vector<8x8xf32>
    %11 = arith.subf %7, %10 : vector<8x8xf32>
    %12 = math.exp %11 : vector<8x8xf32>
    %cst_5 = arith.constant dense<0.000000e+00> : vector<8xf32>
    %13 = vector.multi_reduction <add>, %12, %cst_5 [1] : vector<8x8xf32> to vector<8xf32>
    %14 = vector.shape_cast %13 : vector<8xf32> to vector<8x1xf32>
    %15 = tpu.reciprocal %14 {approx = true} : vector<8x1xf32> -> vector<8x1xf32>
    %16 = arith.mulf %14, %15 : vector<8x1xf32>
    %cst_6 = arith.constant 2.000000e+00 : f32
    %17 = vector.broadcast %cst_6 : f32 to vector<8x1xf32>
    %18 = arith.subf %17, %16 : vector<8x1xf32>
    %19 = arith.mulf %15, %18 : vector<8x1xf32>
    %20 = vector.broadcast %19 : vector<8x1xf32> to vector<8x8xf32>
    %21 = arith.mulf %12, %20 : vector<8x8xf32>
    %c0_7 = arith.constant 0 : index
    %c0_8 = arith.constant 0 : index
    %c0_9 = arith.constant 0 : index
    %22 = vector.load %arg4[%c0_7, %c0_8, %c0_9] : memref<1x8x8xf32, #tpu.memory_space<vmem>>, vector<1x8x8xf32>
    %23 = vector.shape_cast %22 : vector<1x8x8xf32> to vector<8x8xf32>
    %24 = vector.shape_cast %21 : vector<8x8xf32> to vector<1x8x8xf32>
    tpu.vector_store %arg4[%c0_7, %c0_8, %c0_9], %24 {strides = array<i32>} : memref<1x8x8xf32, #tpu.memory_space<vmem>>, vector<1x8x8xf32>,
    %cst_10 = arith.constant dense<0.000000e+00> : vector<8x32xf32>
    %25 = tpu.matmul %21, %1, %cst_10 {dimension_numbers = #tpu.dot_dimension_numbers<[1], [0], [0], [1], [0, 0, 1, 1], [], []>} : vector<8x8xf32>, vector<8x32xf32>, vector<8x32xf32> -> vector<8x32xf32>
    %c0_11 = arith.constant 0 : index
    %c0_12 = arith.constant 0 : index
    %c0_13 = arith.constant 0 : index
    %26 = vector.load %arg3[%c0_11, %c0_12, %c0_13] : memref<1x8x32xf32, #tpu.memory_space<vmem>>, vector<1x8x32xf32>
    %27 = vector.shape_cast %26 : vector<1x8x32xf32> to vector<8x32xf32>
    %28 = vector.shape_cast %25 : vector<8x32xf32> to vector<1x8x32xf32>
    tpu.vector_store %arg3[%c0_11, %c0_12, %c0_13], %28 {strides = array<i32>} : memref<1x8x32xf32, #tpu.memory_space<vmem>>, vector<1x8x32xf32>,
    return
  }
  func.func @transform_0(%arg0: i32, %arg1: i32) -> (i32, i32, i32) {
    %c0_i32 = arith.constant 0 : i32
    %c0_i32_0 = arith.constant 0 : i32
    %c0_i32_1 = arith.constant 0 : i32
    return %arg0, %c0_i32, %c0_i32_0 : i32, i32, i32
  }
  func.func @transform_1(%arg0: i32, %arg1: i32) -> (i32, i32, i32) {
    %c0_i32 = arith.constant 0 : i32
    %c0_i32_0 = arith.constant 0 : i32
    return %arg0, %arg1, %c0_i32 : i32, i32, i32
  }
  func.func @transform_2(%arg0: i32, %arg1: i32) -> (i32, i32, i32) {
    %c0_i32 = arith.constant 0 : i32
    %c0_i32_0 = arith.constant 0 : i32
    return %arg0, %arg1, %c0_i32 : i32, i32, i32
  }
}

</mosaic_0001>

<llo_original>
// kernel: tpu_custom_call.1
$region0: #{tpu_custom_call.1}
  #allocation0 [shape = 'u32[]', space=smem, size = 0x4, offset = 0x4, fixed_abs, tag = 'smem constant byte address 0x4 - core index']
  #allocation1 [shape = 'u32[72,128]{1,0:T(1,128)}', space=vmem, size = 0x9000, scoped, tag = 'internal scratch']
  %s0 = inlined_call_operand.hbm [shape: f32[2,8,32], index: 0, kind: input, shape index: {}]
  %s1 = inlined_call_operand.hbm [shape: f32[2,8,32], index: 1, kind: output, shape index: {0}]
  %s2 = inlined_call_operand.hbm [shape: f32[2,8,8], index: 2, kind: output, shape index: {1}]
  %3 = xla_tuple %s1, %s2
  %s4 = sld [smem:[#allocation0]]
  $region49: #{tpu_custom_call.1} parent=0
    _
  %s6 = ssub.s32 1, %s4
  %s7 = scalar_select 0, %s6, %s4
  $region1: #{tpu_custom_call.1} parent=0
    #allocation2 [shape = 'u8[8192]{0}', space=vmem, size = 0x2000, scoped, tag = 'input window, operand 0']
    #allocation3 [shape = 's32[2]{0}', space=sflag, size = 0x8, scoped, tag = 'scoped memory for tpu_custom_call.1']
    #allocation4 [shape = 's32[2]{0}', space=sflag, size = 0x8, scoped, tag = 'scoped memory for tpu_custom_call.1']
    #allocation5 [shape = 'u8[8192]{0}', space=vmem, size = 0x2000, scoped, tag = 'output window, operand 0']
    #allocation6 [shape = 'u8[8192]{0}', space=vmem, size = 0x2000, scoped, tag = 'output window, operand 1']
    #allocation7 [shape = 's32[2]{0}', space=sflag, size = 0x8, scoped, tag = 'scoped memory for tpu_custom_call.1']
    %8 = vsyncpa [#allocation3], 0
    %s9 = scalar_lea.sflag [#allocation3], 1
    %10 = vsyncpa %s9, 0
    %11 = vsyncpa [#allocation4], 0
    %s12 = scalar_lea.sflag [#allocation4], 1
    %13 = vsyncpa %s12, 0
    %14 = vsyncpa [#allocation7], 0
    %s15 = scalar_lea.sflag [#allocation7], 1
    %16 = vsyncpa %s15, 0
    loop: start=0, step=1, limit=4
    $region2: #{tpu_custom_call.1} parent=1 // loop_pre_header
      _
    $region3: #{tpu_custom_call.1} parent=1 // loop_header
      %s18 = sphi 0, %s22
      %p19 = scmp.ge.s32.totalorder %s18, 4
      %s25 = sphi 0, %s37
      %s26 = sphi 0, %s33
      %s27 = sphi 0, %s25
      %s28 = sphi 0, %s26
      %s29 = sphi 0, %s27
      %s30 = sphi 0, %s28
      %s40 = sphi 0, %s42
      %s43 = sphi 0, %s40
      %s44 = sphi 0, %s43
      %s60 = sphi 0, %s44
      %s68 = sphi 0, %s70
      %s71 = sphi 0, %s68
      %s72 = sphi 0, %s71
      %s88 = sphi 0, %s72
      %s96 = sphi 0, %s98
      %s99 = sphi 0, %s96
      %s100 = sphi 0, %s99
      %s116 = sphi 0, %s100
    $region4: #{tpu_custom_call.1} parent=1 // loop_header_branch
      %21 = sbr.rel (%p19) target = $region8
    $region5: #{tpu_custom_call.1} parent=1 // loop_body
      %s23 = ssub.s32 %s18, 1
      %s24 = ssub.s32 %s18, 2
      %s31 = sadd.s32 1, %s26
      %p32 = scmp.ge.s32.totalorder %s31, 1
      %s33 = scalar_select %p32, 0, %s31
      %s34 = sadd.s32 1, %s25
      %s35 = scalar_select %p32, %s34, %s25
      %p36 = scmp.ge.s32.totalorder %s35, 2
      %s37 = scalar_select %p36, 0, %s35
      %s38 = ssub.s32 %s25, %s37
      %p39 = scmp.eq.s32.totalorder %s38, 0
      %s41 = sadd.s32 %s40, 1
      %s42 = scalar_select %p39, %s40, %s41
      %p45 = pneg %p39
      %p46 = scmp.eq.s32.totalorder %s18, 1
      %p47 = por %p45, %p46
      %p48 = scmp.ne.s32.totalorder %s40, %s43
      %p49 = scmp.eq.s32.totalorder %s18, 0
      %p50 = por %p48, %p49
      %p51 = scmp.ne.s32.totalorder %s40, %s43
      %p52 = scmp.eq.s32.totalorder %s23, 1
      %p53 = por %p51, %p52
      %p54 = scmp.ne.s32.totalorder %s43, %s44
      %p55 = scmp.eq.s32.totalorder %s23, 0
      %p56 = por %p54, %p55
      %p57 = scmp.ne.s32.totalorder %s43, %s44
      %p58 = scmp.eq.s32.totalorder %s24, 1
      %p59 = por %p57, %p58
      %p61 = scmp.ne.s32.totalorder %s44, %s60
      %p62 = scmp.eq.s32.totalorder %s24, 0
      %p63 = por %p61, %p62
      %s64 = ssub.s32 %s25, %s37
      %s65 = ssub.s32 %s26, %s33
      %s66 = sor.u32 %s64, %s65
      %p67 = scmp.eq.s32.totalorder %s66, 0
      %s69 = sadd.s32 %s68, 1
      %s70 = scalar_select %p67, %s68, %s69
      %p73 = pneg %p67
      %p74 = scmp.eq.s32.totalorder %s18, 1
      %p75 = por %p73, %p74
      %p76 = scmp.ne.s32.totalorder %s68, %s71
      %p77 = scmp.eq.s32.totalorder %s18, 0
      %p78 = por %p76, %p77
      %p79 = scmp.ne.s32.totalorder %s68, %s71
      %p80 = scmp.eq.s32.totalorder %s23, 1
      %p81 = por %p79, %p80
      %p82 = scmp.ne.s32.totalorder %s71, %s72
      %p83 = scmp.eq.s32.totalorder %s23, 0
      %p84 = por %p82, %p83
      %p85 = scmp.ne.s32.totalorder %s71, %s72
      %p86 = scmp.eq.s32.totalorder %s24, 1
      %p87 = por %p85, %p86
      %p89 = scmp.ne.s32.totalorder %s72, %s88
      %p90 = scmp.eq.s32.totalorder %s24, 0
      %p91 = por %p89, %p90
      %s92 = ssub.s32 %s25, %s37
      %s93 = ssub.s32 %s26, %s33
      %s94 = sor.u32 %s92, %s93
      %p95 = scmp.eq.s32.totalorder %s94, 0
      %s97 = sadd.s32 %s96, 1
      %s98 = scalar_select %p95, %s96, %s97
      %p101 = pneg %p95
      %p102 = scmp.eq.s32.totalorder %s18, 1
      %p103 = por %p101, %p102
      %p104 = scmp.ne.s32.totalorder %s96, %s99
      %p105 = scmp.eq.s32.totalorder %s18, 0
      %p106 = por %p104, %p105
      %p107 = scmp.ne.s32.totalorder %s96, %s99
      %p108 = scmp.eq.s32.totalorder %s23, 1
      %p109 = por %p107, %p108
      %p110 = scmp.ne.s32.totalorder %s99, %s100
      %p111 = scmp.eq.s32.totalorder %s23, 0
      %p112 = por %p110, %p111
      %p113 = scmp.ne.s32.totalorder %s99, %s100
      %p114 = scmp.eq.s32.totalorder %s24, 1
      %p115 = por %p113, %p114
      %p117 = scmp.ne.s32.totalorder %s100, %s116
      %p118 = scmp.eq.s32.totalorder %s24, 0
      %p119 = por %p117, %p118
      %p120 = scmp.le.s32.totalorder 1, %s18
      %p121 = scmp.lt.s32.totalorder %s18, 3
      %p122 = pnand %p120, %p121
      %p123 = pneg %p122
      // Predicated region
      $region9: #{tpu_custom_call.1} parent=5 // pred_check
        _
      $region10: #{tpu_custom_call.1} parent=5 // pred_check_branch
        %125 = sbr.rel (%p122) target = $region12
      $region11: #{tpu_custom_call.1} parent=5 // pred_region
        %s126 = ssub.s32 %s18, 1
      $region12: #{tpu_custom_call.1} parent=5 // pred_fallthru
        _
      %p127 = scmp.lt.s32.totalorder %s18, 2
      // Predicated region
      $region13: #{tpu_custom_call.1} parent=5 // pred_check
        %p128 = pneg %p127
      $region14: #{tpu_custom_call.1} parent=5 // pred_check_branch
        %130 = sbr.rel (%p128) target = $region16
      $region15: #{tpu_custom_call.1} parent=5 // pred_region
        // Predicated region
        $region17: #{tpu_custom_call.1} parent=15 // pred_check
          %p131 = pneg %p50
        $region18: #{tpu_custom_call.1} parent=15 // pred_check_branch
          %133 = sbr.rel (%p131) target = $region20
        $region19: #{tpu_custom_call.1} parent=15 // pred_region
          %s134 = sand.u32 %s40, 1
          %s135 = scalar_lea.sflag [#allocation3], %s134
          %s136 = sand.u32 %s40, 1
          %s137 = smul.addr %s136, 8
          %s138 = scalar_lea.vmem [#allocation2], %s137
          %140 = vsyncadd %s135, 0
          %s141 = smul.addr %s25, 8
          %s142 = scalar_lea.hbm %s0, %s141
          %s144 = sshll.u32 %s142, 4
          %s145 = int_to_ptr.hbm [resolvable:$true] %s144
          %s146 = sshll.u32 %s138, 4
          %s147 = int_to_ptr.vmem [resolvable:$true] %s146
          %149 = dma.hbm_to_vmem [thread:$0]  %s145, 128, %s147, %s135
        $region20: #{tpu_custom_call.1} parent=15 // pred_fallthru
          _
      $region16: #{tpu_custom_call.1} parent=5 // pred_fallthru
        _
      %p150 = scmp.le.s32.totalorder 1, %s18
      %p151 = scmp.lt.s32.totalorder %s18, 3
      %p152 = pnand %p150, %p151
      %p153 = pneg %p152
      // Predicated region
      $region21: #{tpu_custom_call.1} parent=5 // pred_check
        _
      $region22: #{tpu_custom_call.1} parent=5 // pred_check_branch
        %155 = sbr.rel (%p152) target = $region24
      $region23: #{tpu_custom_call.1} parent=5 // pred_region
        %s156 = ssub.s32 %s18, 1
        %s157 = sand.u32 %s43, 1
        %s158 = scalar_lea.sflag [#allocation3], %s157
        %s159 = sand.u32 %s43, 1
        %s160 = smul.addr %s159, 8
        %s161 = scalar_lea.vmem [#allocation2], %s160
        // Predicated region
        $region25: #{tpu_custom_call.1} parent=23 // pred_check
          %p162 = pneg %p56
        $region26: #{tpu_custom_call.1} parent=23 // pred_check_branch
          %164 = sbr.rel (%p162) target = $region28
        $region27: #{tpu_custom_call.1} parent=23 // pred_region
          %166 = dma.done %s158, 128
        $region28: #{tpu_custom_call.1} parent=23 // pred_fallthru
          _
        %s167 = sand.u32 %s43, 1
        %s168 = scalar_lea.sflag [#allocation3], %s167
        %s169 = sand.u32 %s43, 1
        %s170 = smul.addr %s169, 8
        %s171 = scalar_lea.vmem [#allocation2], %s170
        %p172 = pneg %p56
        %p173 = pneg %p53
        %p174 = pneg %p84
        %p175 = pneg %p81
        %s176 = sand.u32 %s71, 1
        %s177 = scalar_lea.sflag [#allocation4], %s176
        %s178 = sand.u32 %s71, 1
        %s179 = smul.addr %s178, 8
        %s180 = scalar_lea.vmem [#allocation5], %s179
        %p181 = pneg %p112
        %p182 = pneg %p109
        %s183 = sand.u32 %s99, 1
        %s184 = scalar_lea.sflag [#allocation7], %s183
        %s185 = sand.u32 %s99, 1
        %s186 = smul.addr %s185, 8
        %s187 = scalar_lea.vmem [#allocation6], %s186
        %v188 = vld [vmem:[%s161] sm:$0xff]
        %s189 = smul.u32 %s28, 8
        %s190 = scalar_lea.vmem %s161, %s189 [#allocation2]
        %v191 = vld [vmem:[%s190] sm:$0xff]
        %vm192 = vcmask 261120
        %v194 = vsel %vm192, %v191, 0
        %v197 = vsel %vm192, %v188, 0
        %199 = vmatpush.xpose.msra.mxu0 0.0
        %200 = vmatpush.xpose.msra.mxu0 0.0
        %201 = vmatpush.xpose.msra.mxu0 0.0
        %202 = vmatpush.xpose.msra.mxu0 0.0
        %203 = vmatpush.xpose.msra.mxu0 0.0
        %204 = vmatpush.xpose.msra.mxu0 0.0
        %205 = vmatpush.xpose.msra.mxu0 0.0
        %206 = vmatpush.xpose.msra.mxu0 0.0
        %207 = vmatpush.xpose.msra.mxu0 0.0
        %208 = vmatpush.xpose.msra.mxu0 0.0
        %209 = vmatpush.xpose.msra.mxu0 0.0
        %210 = vmatpush.xpose.msra.mxu0 0.0
        %211 = vmatpush.xpose.msra.mxu0 0.0
        %212 = vmatpush.xpose.msra.mxu0 0.0
        %213 = vmatpush.xpose.msra.mxu0 0.0
        %214 = vmatpush.xpose.msra.mxu0 %v197
        %215 = vmatmul.f32.gmra.mxu0 %v194
        %v216 = vpop.f32.mrf.mxu0
        %v217 = vadd.f32 0.0, %v216
        %218 = vdwg.mxu0
        %vm219 = vcmask 64512
        %v220 = vsel %vm219, %v217, -inf
        %221 = vmax.xlane.f32.xlu0 %v220
        %v222 = vpop.xlane.xlu0 %221
        %v223 = vsub.f32 %v217, %v222
        %v224 = vmul.f32 %v223, 1.442695
        %v225 = vpow.pop %v224
        %v226 = vsel %vm219, %v225, 0.0
        %227 = vadd.xlane.f32.xlu0 %v226
        %v228 = vpop.xlane.xlu0 %227
        %v229 = vrcp.pop %v228
        %v230 = vmul.f32 %v228, %v229
        %v231 = vsub.f32 2.0, %v230
        %v232 = vmul.f32 %v229, %v231
        %v233 = vmul.f32 %v225, %v232
        %234 = vst.msk [vmem:[%s187] sm:$0xff] %vm219, %v233
        %v236 = vsel %vm219, %v233, 0
        %238 = vmatpush.msra.mxu0 0.0
        %239 = vmatpush.msra.mxu0 0.0
        %240 = vmatpush.msra.mxu0 0.0
        %241 = vmatpush.msra.mxu0 0.0
        %242 = vmatpush.msra.mxu0 0.0
        %243 = vmatpush.msra.mxu0 0.0
        %244 = vmatpush.msra.mxu0 0.0
        %245 = vmatpush.msra.mxu0 0.0
        %246 = vmatpush.msra.mxu0 0.0
        %247 = vmatpush.msra.mxu0 0.0
        %248 = vmatpush.msra.mxu0 0.0
        %249 = vmatpush.msra.mxu0 0.0
        %250 = vmatpush.msra.mxu0 0.0
        %251 = vmatpush.msra.mxu0 0.0
        %252 = vmatpush.msra.mxu0 0.0
        %253 = vmatpush.msra.mxu0 %v188
        %254 = vmatmul.f32.gmra.mxu0 %v236
        %v255 = vpop.f32.mrf.mxu0
        %v256 = vadd.f32 0.0, %v255
        %257 = vdwg.mxu0
        %258 = vst.msk [vmem:[%s180] sm:$0xff] %vm192, %v256
        %s259 = sand.u32 %s71, 1
        %s260 = scalar_lea.sflag [#allocation4], %s259
        %s261 = sand.u32 %s71, 1
        %s262 = smul.addr %s261, 8
        %s263 = scalar_lea.vmem [#allocation5], %s262
        %s264 = sand.u32 %s99, 1
        %s265 = scalar_lea.sflag [#allocation7], %s264
        %s266 = sand.u32 %s99, 1
        %s267 = smul.addr %s266, 8
        %s268 = scalar_lea.vmem [#allocation6], %s267
        // Predicated region
        $region29: #{tpu_custom_call.1} parent=23 // pred_check
          %p269 = pneg %p81
        $region30: #{tpu_custom_call.1} parent=23 // pred_check_branch
          %271 = sbr.rel (%p269) target = $region32
        $region31: #{tpu_custom_call.1} parent=23 // pred_region
          %273 = vsyncadd %s260, 0
          %s274 = sadd.s32 %s28, %s27
          %s275 = smul.addr %s274, 8
          %s276 = scalar_lea.hbm %s1, %s275
          %s278 = sshll.u32 %s263, 4
          %s279 = int_to_ptr.vmem [resolvable:$true] %s278
          %s280 = sshll.u32 %s276, 4
          %s281 = int_to_ptr.hbm [resolvable:$true] %s280
          %283 = dma.vmem_to_hbm [thread:$0]  %s279, 128, %s281, %s260
        $region32: #{tpu_custom_call.1} parent=23 // pred_fallthru
          _
        // Predicated region
        $region33: #{tpu_custom_call.1} parent=23 // pred_check
          %p284 = pneg %p109
        $region34: #{tpu_custom_call.1} parent=23 // pred_check_branch
          %286 = sbr.rel (%p284) target = $region36
        $region35: #{tpu_custom_call.1} parent=23 // pred_region
          %288 = vsyncadd %s265, 0
          %s289 = sadd.s32 %s28, %s27
          %s290 = smul.addr %s289, 8
          %s291 = scalar_lea.hbm %s2, %s290
          %s293 = sshll.u32 %s268, 4
          %s294 = int_to_ptr.vmem [resolvable:$true] %s293
          %s295 = sshll.u32 %s291, 4
          %s296 = int_to_ptr.hbm [resolvable:$true] %s295
          %298 = dma.vmem_to_hbm [thread:$0]  %s294, 128, %s296, %s265
        $region36: #{tpu_custom_call.1} parent=23 // pred_fallthru
          _
      $region24: #{tpu_custom_call.1} parent=5 // pred_fallthru
        _
      %p299 = scmp.le.s32.totalorder 2, %s18
      // Predicated region
      $region37: #{tpu_custom_call.1} parent=5 // pred_check
        %p300 = pneg %p299
      $region38: #{tpu_custom_call.1} parent=5 // pred_check_branch
        %302 = sbr.rel (%p300) target = $region40
      $region39: #{tpu_custom_call.1} parent=5 // pred_region
        %s303 = ssub.s32 %s18, 2
        // Predicated region
        $region41: #{tpu_custom_call.1} parent=39 // pred_check
          %p304 = pneg %p87
        $region42: #{tpu_custom_call.1} parent=39 // pred_check_branch
          %306 = sbr.rel (%p304) target = $region44
        $region43: #{tpu_custom_call.1} parent=39 // pred_region
          %s307 = sand.u32 %s72, 1
          %s308 = scalar_lea.sflag [#allocation4], %s307
          %s309 = sand.u32 %s72, 1
          %s310 = smul.addr %s309, 8
          %s311 = scalar_lea.vmem [#allocation5], %s310
          %313 = dma.done %s308, 128
        $region44: #{tpu_custom_call.1} parent=39 // pred_fallthru
          _
        // Predicated region
        $region45: #{tpu_custom_call.1} parent=39 // pred_check
          %p314 = pneg %p115
        $region46: #{tpu_custom_call.1} parent=39 // pred_check_branch
          %316 = sbr.rel (%p314) target = $region48
        $region47: #{tpu_custom_call.1} parent=39 // pred_region
          %s317 = sand.u32 %s100, 1
          %s318 = scalar_lea.sflag [#allocation7], %s317
          %s319 = sand.u32 %s100, 1
          %s320 = smul.addr %s319, 8
          %s321 = scalar_lea.vmem [#allocation6], %s320
          %323 = dma.done %s318, 128
        $region48: #{tpu_custom_call.1} parent=39 // pred_fallthru
          _
      $region40: #{tpu_custom_call.1} parent=5 // pred_fallthru
        _
    $region6: #{tpu_custom_call.1} parent=1 // loop_footer
      %s22 = sadd.s32 1, %s18
    $region7: #{tpu_custom_call.1} parent=1 // loop_footer_branch
      %17 = sbr.rel target = $region3
    $region8: #{tpu_custom_call.1} parent=1 // loop_exit
      _
    %324 = vsyncpa [#allocation3], 1
    %s325 = scalar_lea.sflag [#allocation3], 1
    %326 = vsyncpa %s325, 1
    %327 = vsyncpa [#allocation4], 1
    %s328 = scalar_lea.sflag [#allocation4], 1
    %329 = vsyncpa %s328, 1
    %330 = vsyncpa [#allocation7], 1
    %s331 = scalar_lea.sflag [#allocation7], 1
    %332 = vsyncpa %s331, 1

</llo_original>
